<compile_context>
chip_gen: v6e
topology: v6e:2x2x1
jax: 0.10.0
libtpu: 0.0.40
codegen_flags: <defaults>
</compile_context>

<pallas_src>
import jax
import jax.numpy as jnp
from jax.experimental import pallas as pl
from jax.experimental.pallas import tpu as pltpu


def _round_up(x, m):
    return ((x + m - 1) // m) * m


# --------------------------------------------------------------------------
# Kernel A: fused input projection for all timesteps (MXU-dense, parallel)
# --------------------------------------------------------------------------
def input_proj_kernel(x_ref, w_ref, b_ref, o_ref):
    # x_ref: (TM, E); w_ref: (E, 3*H_pad); b_ref: (1, 3*H_pad); o_ref: (TM, 3*H_pad)
    o_ref[...] = (
        jnp.dot(x_ref[...], w_ref[...], preferred_element_type=jnp.float32)
        + b_ref[...]
    ).astype(o_ref.dtype)


# --------------------------------------------------------------------------
# Kernel B: GRU recurrence only (sequential over time chunks)
# --------------------------------------------------------------------------
def gru_recurrent_kernel(gx_ref, h0_ref, len_ref, w_h_ref, b_hn_ref,
                         out_h_ref, h_scratch):
    # gx_ref:    (TT, B, 3H)  precomputed x-projections (+ combined biases)
    # h0_ref:    (B, H)       initial hidden
    # len_ref:   (B, 1)       sequence lengths (int32)
    # w_h_ref:   (H, 3H)      fused hidden weights [r|z|n]
    # b_hn_ref:  (1, H)       hidden bias of the n-gate (must stay inside r*(...))
    # out_h_ref: (TT, B, H)   masked GRU outputs
    # h_scratch: VMEM (B, H)  hidden carried across grid steps
    c = pl.program_id(0)
    TT = gx_ref.shape[0]
    H = h_scratch.shape[1]

    @pl.when(c == 0)
    def _():
        h_scratch[...] = h0_ref[...]

    lens = len_ref[...]          # (B, 1) int32
    w_h = w_h_ref[...]           # (H, 3H)
    b_hn = b_hn_ref[...]         # (1, H)

    def step(t_local, h_prev):
        t = c * TT + t_local                               # global timestep
        gx = gx_ref[t_local]                               # (B, 3H)
        gh = jnp.dot(h_prev, w_h, preferred_element_type=jnp.float32)  # (B, 3H)

        # PyTorch GRU gate equations (gate order r, z, n); gx already holds
        # b_ir+b_hr, b_iz+b_hz, b_in in its three slots.
        r = jax.nn.sigmoid(gx[:, 0:H] + gh[:, 0:H])
        z = jax.nn.sigmoid(gx[:, H:2 * H] + gh[:, H:2 * H])
        n = jnp.tanh(gx[:, 2 * H:3 * H] + r * (gh[:, 2 * H:3 * H] + b_hn))
        h_new = (1.0 - z) * n + z * h_prev

        # packed-sequence semantics: freeze hidden at t >= length[b]
        valid = lens > t                                   # (B, 1) bool
        h_next = jnp.where(valid, h_new, h_prev)
        # unpacked output is zero at padded positions (pad_packed_sequence)
        out_h_ref[t_local] = jnp.where(valid, h_next, 0.0).astype(out_h_ref.dtype)
        return h_next

    h_final = jax.lax.fori_loop(0, TT, step, h_scratch[...], unroll=True)
    h_scratch[...] = h_final


# --------------------------------------------------------------------------
# Kernel C: vocab projection (MXU-dense, parallel over rows and vocab tiles)
# --------------------------------------------------------------------------
def output_proj_kernel(h_ref, w_ref, b_ref, o_ref):
    # h_ref: (TM, H_pad); w_ref: (H_pad, TV); b_ref: (1, TV); o_ref: (TM, TV)
    o_ref[...] = (
        jnp.dot(h_ref[...], w_ref[...], preferred_element_type=jnp.float32)
        + b_ref[...]
    ).astype(o_ref.dtype)


# --------------------------------------------------------------------------
# Wrapper
# --------------------------------------------------------------------------
def decoder_forward(token_ids, lengths, h0, params, *, tt=8, tm=128, tv=128):
    """token_ids: (T, B) int32; lengths: (B,) int32; h0: (1, B, H) float32."""
    T, B = token_ids.shape
    E = params["embedding"].shape[1]
    H = params["w_hr"].shape[0]
    V = params["w_proj"].shape[1]
    f32 = jnp.float32

    B_pad = _round_up(B, 8)
    H_pad = _round_up(H, 128)
    V_pad = _round_up(V, tv)
    T_pad = _round_up(T, tt)
    G = 3 * H_pad

    # ---- one-time parameter packing / padding (plain-JAX glue) ----
    def pad2(a, s0, s1):
        return jnp.zeros((s0, s1), f32).at[: a.shape[0], : a.shape[1]].set(a)

    w_i = jnp.zeros((E, G), f32)
    w_i = w_i.at[:, 0:H].set(params["w_ir"])
    w_i = w_i.at[:, H_pad:H_pad + H].set(params["w_iz"])
    w_i = w_i.at[:, 2 * H_pad:2 * H_pad + H].set(params["w_in"])

    b_x = jnp.zeros((1, G), f32)
    b_x = b_x.at[:, 0:H].set(params["b_ir"] + params["b_hr"])
    b_x = b_x.at[:, H_pad:H_pad + H].set(params["b_iz"] + params["b_hz"])
    b_x = b_x.at[:, 2 * H_pad:2 * H_pad + H].set(params["b_in"])

    w_h = jnp.zeros((H_pad, G), f32)
    w_h = w_h.at[:H, 0:H].set(params["w_hr"])
    w_h = w_h.at[:H, H_pad:H_pad + H].set(params["w_hz"])
    w_h = w_h.at[:H, 2 * H_pad:2 * H_pad + H].set(params["w_hn"])

    b_hn = pad2(params["b_hn"], 1, H_pad)
    w_proj = pad2(params["w_proj"], H_pad, V_pad)
    b_proj = pad2(params["b_proj"], 1, V_pad)

    # ---- embedding lookup (gather, glue) + zero-padding ----
    x_emb = jnp.take(params["embedding"], token_ids, axis=0)          # (T, B, E)
    x_emb = jnp.zeros((T_pad, B_pad, E), f32).at[:T, :B, :].set(x_emb)

    h0_p = jnp.zeros((B_pad, H_pad), f32).at[:B, :H].set(h0[0])
    lens_p = jnp.zeros((B_pad, 1), jnp.int32).at[:B, 0].set(
        lengths.astype(jnp.int32))

    # ---- Kernel A: fused input projection for all timesteps ----
    M = T_pad * B_pad
    M_pad = _round_up(M, tm)
    x2d = jnp.zeros((M_pad, E), f32).at[:M].set(x_emb.reshape(M, E))

    gates_x = pl.pallas_call(
        input_proj_kernel,
        out_shape=jax.ShapeDtypeStruct((M_pad, G), f32),
        grid_spec=pltpu.PrefetchScalarGridSpec(
            num_scalar_prefetch=0,
            grid=(M_pad // tm,),
            in_specs=[
                pl.BlockSpec((tm, E), lambda i: (i, 0)),
                pl.BlockSpec((E, G), lambda i: (0, 0)),
                pl.BlockSpec((1, G), lambda i: (0, 0)),
            ],
            out_specs=pl.BlockSpec((tm, G), lambda i: (i, 0)),
        ),
        compiler_params=pltpu.CompilerParams(
            dimension_semantics=("parallel",)),
    )(x2d, w_i, b_x)
    gates_x = gates_x[:M].reshape(T_pad, B_pad, G)

    # ---- Kernel B: GRU recurrence (only the serial part stays serial) ----
    out_h = pl.pallas_call(
        gru_recurrent_kernel,
        out_shape=jax.ShapeDtypeStruct((T_pad, B_pad, H_pad), f32),
        grid_spec=pltpu.PrefetchScalarGridSpec(
            num_scalar_prefetch=0,
            grid=(T_pad // tt,),
            in_specs=[
                pl.BlockSpec((tt, B_pad, G), lambda c: (c, 0, 0)),
                pl.BlockSpec((B_pad, H_pad), lambda c: (0, 0)),
                pl.BlockSpec((B_pad, 1), lambda c: (0, 0)),
                pl.BlockSpec((H_pad, G), lambda c: (0, 0)),
                pl.BlockSpec((1, H_pad), lambda c: (0, 0)),
            ],
            out_specs=pl.BlockSpec((tt, B_pad, H_pad), lambda c: (c, 0, 0)),
            scratch_shapes=[pltpu.VMEM((B_pad, H_pad), f32)],
        ),
        compiler_params=pltpu.CompilerParams(
            dimension_semantics=("arbitrary",)),  # carries hidden across chunks
    )(gates_x, h0_p, lens_p, w_h, b_hn)

    # ---- Kernel C: vocab projection, lane-dense 128x128 tiles, parallel ----
    M2 = T_pad * B_pad
    M2_pad = _round_up(M2, tm)
    h2d = jnp.zeros((M2_pad, H_pad), f32).at[:M2].set(out_h.reshape(M2, H_pad))

    logits = pl.pallas_call(
        output_proj_kernel,
        out_shape=jax.ShapeDtypeStruct((M2_pad, V_pad), f32),
        grid_spec=pltpu.PrefetchScalarGridSpec(
            num_scalar_prefetch=0,
            grid=(M2_pad // tm, V_pad // tv),
            in_specs=[
                pl.BlockSpec((tm, H_pad), lambda i, j: (i, 0)),
                pl.BlockSpec((H_pad, tv), lambda i, j: (0, j)),
                pl.BlockSpec((1, tv), lambda i, j: (0, j)),
            ],
            out_specs=pl.BlockSpec((tm, tv), lambda i, j: (i, j)),
        ),
        compiler_params=pltpu.CompilerParams(
            dimension_semantics=("parallel", "parallel")),
    )(h2d, w_proj, b_proj)

    logits = logits[:M2].reshape(T_pad, B_pad, V_pad)[:T, :B, :V]
    return logits


# --------------------------------------------------------------------------
# Pure-JAX reference mirroring PyTorch Embedding + GRU(pack/unpack) + Linear
# --------------------------------------------------------------------------
def decoder_reference(token_ids, lengths, h0, params):
    x_emb = jnp.take(params["embedding"], token_ids, axis=0)  # (T, B, E)
    h = h0[0]
    T = token_ids.shape[0]

    def step(h, inp):
        x_t, t = inp
        r = jax.nn.sigmoid(x_t @ params["w_ir"] + h @ params["w_hr"]
                           + params["b_ir"] + params["b_hr"])
        z = jax.nn.sigmoid(x_t @ params["w_iz"] + h @ params["w_hz"]
                           + params["b_iz"] + params["b_hz"])
        n = jnp.tanh(x_t @ params["w_in"] + params["b_in"]
                     + r * (h @ params["w_hn"] + params["b_hn"]))
        h_new = (1.0 - z) * n + z * h
        valid = (lengths > t).reshape(-1, 1)
        h_next = jnp.where(valid, h_new, h)
        out_h = jnp.where(valid, h_next, 0.0)
        return h_next, out_h

    _, outs = jax.lax.scan(step, h, (x_emb, jnp.arange(T)))
    return outs @ params["w_proj"] + params["b_proj"]


def make_params(key, vocab_size, embed_size, hidden_size):
    ks = jax.random.split(key, 16)
    s = 0.1
    return {
        "embedding": jax.random.normal(ks[0], (vocab_size, embed_size), jnp.float32) * s,
        "w_ir": jax.random.normal(ks[1], (embed_size, hidden_size), jnp.float32) * s,
        "w_iz": jax.random.normal(ks[2], (embed_size, hidden_size), jnp.float32) * s,
        "w_in": jax.random.normal(ks[3], (embed_size, hidden_size), jnp.float32) * s,
        "w_hr": jax.random.normal(ks[4], (hidden_size, hidden_size), jnp.float32) * s,
        "w_hz": jax.random.normal(ks[5], (hidden_size, hidden_size), jnp.float32) * s,
        "w_hn": jax.random.normal(ks[6], (hidden_size, hidden_size), jnp.float32) * s,
        "b_ir": jax.random.normal(ks[7], (1, hidden_size), jnp.float32) * s,
        "b_iz": jax.random.normal(ks[8], (1, hidden_size), jnp.float32) * s,
        "b_in": jax.random.normal(ks[9], (1, hidden_size), jnp.float32) * s,
        "b_hr": jax.random.normal(ks[10], (1, hidden_size), jnp.float32) * s,
        "b_hz": jax.random.normal(ks[11], (1, hidden_size), jnp.float32) * s,
        "b_hn": jax.random.normal(ks[12], (1, hidden_size), jnp.float32) * s,
        "w_proj": jax.random.normal(ks[13], (hidden_size, vocab_size), jnp.float32) * s,
        "b_proj": jax.random.normal(ks[14], (1, vocab_size), jnp.float32) * s,
    }


if __name__ == "__main__":
    vocab_size, embed_size, hidden_size = 64, 32, 32
    T, B = 8, 8

    key = jax.random.PRNGKey(0)
    k_tok, k_h0, k_par = jax.random.split(key, 3)

    token_ids = jax.random.randint(k_tok, (T, B), 0, vocab_size, dtype=jnp.int32)
    lengths = jnp.array([8, 7, 6, 5, 4, 3, 8, 2], dtype=jnp.int32)   # decoder_lengths
    h0 = jax.random.normal(k_h0, (1, B, hidden_size), jnp.float32) * 0.1
    params = make_params(k_par, vocab_size, embed_size, hidden_size)

    out = decoder_forward(token_ids, lengths, h0, params)
    out = jax.block_until_ready(out)

    ref = decoder_reference(token_ids, lengths, h0, params)
    assert out.shape == (T, B, vocab_size)
    assert jnp.allclose(out, ref, atol=1e-4, rtol=1e-4), "mismatch vs reference"

    print("KERNEL_OK")
</pallas_src>

<mosaic_0001>
module attributes {stable_mosaic.version = 11 : i64} {
  func.func @input_proj_kernel(%arg0: i32, %arg1: memref<128x32xf32, #tpu.memory_space<vmem>>, %arg2: memref<32x384xf32, #tpu.memory_space<vmem>>, %arg3: memref<1x384xf32, #tpu.memory_space<vmem>>, %arg4: memref<128x384xf32, #tpu.memory_space<vmem>>) attributes {dimension_semantics = [#tpu.dimension_semantics<parallel>], iteration_bounds = array<i64: 1>, scalar_prefetch = 0 : i64, scratch_operands = 0 : i64, tpu.core_type = #tpu.core_type<tc>, window_params = [{transform_indices = @transform_0, window_bounds = array<i64: 128, 32>}, {pipeline_mode = #tpu.pipeline_mode<synchronous>, transform_indices = @transform_1, window_bounds = array<i64: 32, 384>}, {pipeline_mode = #tpu.pipeline_mode<synchronous>, transform_indices = @transform_2, window_bounds = array<i64: 1, 384>}, {transform_indices = @transform_3, window_bounds = array<i64: 128, 384>}]} {
    %c0 = arith.constant 0 : index
    %c0_0 = arith.constant 0 : index
    %0 = vector.load %arg1[%c0, %c0_0] : memref<128x32xf32, #tpu.memory_space<vmem>>, vector<128x32xf32>
    %c0_1 = arith.constant 0 : index
    %c0_2 = arith.constant 0 : index
    %1 = vector.load %arg2[%c0_1, %c0_2] : memref<32x384xf32, #tpu.memory_space<vmem>>, vector<32x384xf32>
    %cst = arith.constant dense<0.000000e+00> : vector<128x384xf32>
    %2 = tpu.matmul %0, %1, %cst {dimension_numbers = #tpu.dot_dimension_numbers<[1], [0], [0], [1], [0, 0, 1, 1], [], []>} : vector<128x32xf32>, vector<32x384xf32>, vector<128x384xf32> -> vector<128x384xf32>
    %c0_3 = arith.constant 0 : index
    %c0_4 = arith.constant 0 : index
    %3 = vector.load %arg3[%c0_3, %c0_4] : memref<1x384xf32, #tpu.memory_space<vmem>>, vector<1x384xf32>
    %4 = vector.broadcast %3 : vector<1x384xf32> to vector<128x384xf32>
    %5 = arith.addf %2, %4 : vector<128x384xf32>
    %c0_5 = arith.constant 0 : index
    %c0_6 = arith.constant 0 : index
    %6 = vector.load %arg4[%c0_5, %c0_6] : memref<128x384xf32, #tpu.memory_space<vmem>>, vector<128x384xf32>
    tpu.vector_store %arg4[%c0_5, %c0_6], %5 {strides = array<i32>} : memref<128x384xf32, #tpu.memory_space<vmem>>, vector<128x384xf32>,
    return
  }
  func.func @transform_0(%arg0: i32) -> (i32, i32) {
    %c0_i32 = arith.constant 0 : i32
    %c0_i32_0 = arith.constant 0 : i32
    return %arg0, %c0_i32 : i32, i32
  }
  func.func @transform_1(%arg0: i32) -> (i32, i32) {
    %c0_i32 = arith.constant 0 : i32
    %c0_i32_0 = arith.constant 0 : i32
    %c0_i32_1 = arith.constant 0 : i32
    return %c0_i32, %c0_i32_0 : i32, i32
  }
  func.func @transform_2(%arg0: i32) -> (i32, i32) {
    %c0_i32 = arith.constant 0 : i32
    %c0_i32_0 = arith.constant 0 : i32
    %c0_i32_1 = arith.constant 0 : i32
    return %c0_i32, %c0_i32_0 : i32, i32
  }
  func.func @transform_3(%arg0: i32) -> (i32, i32) {
    %c0_i32 = arith.constant 0 : i32
    %c0_i32_0 = arith.constant 0 : i32
    return %arg0, %c0_i32 : i32, i32
  }
}

</mosaic_0001>

<llo_original>
// kernel: tpu_custom_call.1
$region0: #{tpu_custom_call.1}
  #allocation0 [shape = 'u32[]', space=smem, size = 0x4, offset = 0x4, fixed_abs, tag = 'smem constant byte address 0x4 - core index']
  #allocation1 [shape = 'u32[144,128]{1,0:T(1,128)}', space=vmem, size = 0x12000, scoped, tag = 'internal scratch']
  %s0 = inlined_call_operand.vmem [shape: f32[128,32], index: 0, kind: input, shape index: {}]
  %s1 = inlined_call_operand.vmem [shape: f32[32,384], index: 1, kind: input, shape index: {}]
  %s2 = inlined_call_operand.vmem [shape: f32[1,384], index: 2, kind: input, shape index: {}]
  %s3 = inlined_call_operand.hbm [shape: f32[128,384], index: 3, kind: output, shape index: {}]
  %s4 = sld [smem:[#allocation0]]
  $region22: #{tpu_custom_call.1} parent=0
    _
  %s6 = ssub.s32 1, %s4
  %s7 = scalar_select 0, %s6, %s4
  $region1: #{tpu_custom_call.1} parent=0
    #allocation2 [shape = 'u8[196608]{0}', space=vmem, size = 0x30000, scoped, tag = 'output window, operand 0, single buffered']
    #allocation3 [shape = 's32[1]{0}', space=sflag, size = 0x4, scoped, tag = 'scoped memory for tpu_custom_call.1']
    %8 = vsyncpa [#allocation3], 0
    // Predicated region
    $region2: #{tpu_custom_call.1} parent=1 // pred_check
      _
    $region3: #{tpu_custom_call.1} parent=1 // pred_check_branch
      %10 = sbr.rel (0) target = $region5
    $region4: #{tpu_custom_call.1} parent=1 // pred_region
      _
    $region5: #{tpu_custom_call.1} parent=1 // pred_fallthru
      _
    // Predicated region
    $region6: #{tpu_custom_call.1} parent=1 // pred_check
      _
    $region7: #{tpu_custom_call.1} parent=1 // pred_check_branch
      %12 = sbr.rel (0) target = $region9
    $region8: #{tpu_custom_call.1} parent=1 // pred_region
      _
    $region9: #{tpu_custom_call.1} parent=1 // pred_fallthru
      _
    // Predicated region
    $region10: #{tpu_custom_call.1} parent=1 // pred_check
      _
    $region11: #{tpu_custom_call.1} parent=1 // pred_check_branch
      %14 = sbr.rel (0) target = $region13
    $region12: #{tpu_custom_call.1} parent=1 // pred_region
      _
    $region13: #{tpu_custom_call.1} parent=1 // pred_fallthru
      _
    %v15 = vld [vmem:[%s0] sm:$0xff]
    %v16 = vld [vmem:[%s0 + $0x8] sm:$0xff]
    %v17 = vld [vmem:[%s0 + $0x10] sm:$0xff]
    %v18 = vld [vmem:[%s0 + $0x18] sm:$0xff]
    %v19 = vld [vmem:[%s0 + $0x20] sm:$0xff]
    %v20 = vld [vmem:[%s0 + $0x28] sm:$0xff]
    %v21 = vld [vmem:[%s0 + $0x30] sm:$0xff]
    %v22 = vld [vmem:[%s0 + $0x38] sm:$0xff]
    %v23 = vld [vmem:[%s0 + $0x40] sm:$0xff]
    %v24 = vld [vmem:[%s0 + $0x48] sm:$0xff]
    %v25 = vld [vmem:[%s0 + $0x50] sm:$0xff]
    %v26 = vld [vmem:[%s0 + $0x58] sm:$0xff]
    %v27 = vld [vmem:[%s0 + $0x60] sm:$0xff]
    %v28 = vld [vmem:[%s0 + $0x68] sm:$0xff]
    %v29 = vld [vmem:[%s0 + $0x70] sm:$0xff]
    %v30 = vld [vmem:[%s0 + $0x78] sm:$0xff]
    %v31 = vld [vmem:[%s1] sm:$0xff]
    %v32 = vld [vmem:[%s1 + $0x8] sm:$0xff]
    %v33 = vld [vmem:[%s1 + $0x10] sm:$0xff]
    %v34 = vld [vmem:[%s1 + $0x18] sm:$0xff]
    %v35 = vld [vmem:[%s1 + $0x20] sm:$0xff]
    %v36 = vld [vmem:[%s1 + $0x28] sm:$0xff]
    %v37 = vld [vmem:[%s1 + $0x30] sm:$0xff]
    %v38 = vld [vmem:[%s1 + $0x38] sm:$0xff]
    %v39 = vld [vmem:[%s1 + $0x40] sm:$0xff]
    %v40 = vld [vmem:[%s1 + $0x48] sm:$0xff]
    %v41 = vld [vmem:[%s1 + $0x50] sm:$0xff]
    %v42 = vld [vmem:[%s1 + $0x58] sm:$0xff]
    %v43 = vld [vmem:[%s2] sm:$0x7]
    %v45 = vlaneseq
    %v46 = vshrl.u32 %v45, 7
    %v47 = vsub.s32 0, %v46
    %v48 = vrot.slane %v43, %v47
    %v49 = vlaneseq
    %v50 = vshrl.u32 %v49, 7
    %v51 = vsub.s32 1, %v50
    %v52 = vrot.slane %v43, %v51
    %v53 = vlaneseq
    %v54 = vshrl.u32 %v53, 7
    %v55 = vsub.s32 2, %v54
    %v56 = vrot.slane %v43, %v55
    %vm60 = vcmask 261120
    %v62 = vsel %vm60, %v15, 0
    %v65 = vsel %vm60, %v16, 0
    %v68 = vsel %vm60, %v17, 0
    %v71 = vsel %vm60, %v18, 0
    %v74 = vsel %vm60, %v19, 0
    %v77 = vsel %vm60, %v20, 0
    %v80 = vsel %vm60, %v21, 0
    %v83 = vsel %vm60, %v22, 0
    %v86 = vsel %vm60, %v23, 0
    %v89 = vsel %vm60, %v24, 0
    %v92 = vsel %vm60, %v25, 0
    %v95 = vsel %vm60, %v26, 0
    %v98 = vsel %vm60, %v27, 0
    %v101 = vsel %vm60, %v28, 0
    %v104 = vsel %vm60, %v29, 0
    %v107 = vsel %vm60, %v30, 0
    %109 = vmatprep.subr.mxu0 0.0
    %110 = vmatpush1.msra.mxu0 0.0
    %111 = vmatprep.subr.mxu0 0.0
    %112 = vmatpush1.msra.mxu0 0.0
    %113 = vmatprep.subr.mxu0 0.0
    %114 = vmatpush1.msra.mxu0 0.0
    %115 = vmatprep.subr.mxu0 0.0
    %116 = vmatpush1.msra.mxu0 0.0
    %117 = vmatprep.subr.mxu0 0.0
    %118 = vmatpush1.msra.mxu0 0.0
    %119 = vmatprep.subr.mxu0 0.0
    %120 = vmatpush1.msra.mxu0 0.0
    %121 = vmatprep.subr.mxu0 0.0
    %122 = vmatpush1.msra.mxu0 0.0
    %123 = vmatprep.subr.mxu0 0.0
    %124 = vmatpush1.msra.mxu0 0.0
    %125 = vmatprep.subr.mxu0 0.0
    %126 = vmatpush1.msra.mxu0 0.0
    %127 = vmatprep.subr.mxu0 0.0
    %128 = vmatpush1.msra.mxu0 0.0
    %129 = vmatprep.subr.mxu0 0.0
    %130 = vmatpush1.msra.mxu0 0.0
    %131 = vmatprep.subr.mxu0 0.0
    %132 = vmatpush1.msra.mxu0 0.0
    %133 = vmatprep.subr.mxu0 %v41
    %134 = vmatpush1.msra.mxu0 %v40
    %135 = vmatprep.subr.mxu0 %v38
    %136 = vmatpush1.msra.mxu0 %v37
    %137 = vmatprep.subr.mxu0 %v35
    %138 = vmatpush1.msra.mxu0 %v34
    %139 = vmatprep.subr.mxu0 %v32
    %140 = vmatpush1.msra.mxu0 %v31
    %141 = vmatprep.subr.mxu0 0.0
    %142 = vmatpush2.msra.mxu0 0.0
    %143 = vmatprep.subr.mxu0 0.0
    %144 = vmatpush2.msra.mxu0 0.0
    %145 = vmatprep.subr.mxu0 0.0
    %146 = vmatpush2.msra.mxu0 0.0
    %147 = vmatprep.subr.mxu0 0.0
    %148 = vmatpush2.msra.mxu0 0.0
    %149 = vmatprep.subr.mxu0 0.0
    %150 = vmatpush2.msra.mxu0 0.0
    %151 = vmatprep.subr.mxu0 0.0
    %152 = vmatpush2.msra.mxu0 0.0
    %153 = vmatprep.subr.mxu0 0.0
    %154 = vmatpush2.msra.mxu0 0.0
    %155 = vmatprep.subr.mxu0 0.0
    %156 = vmatpush2.msra.mxu0 0.0
    %157 = vmatprep.subr.mxu0 0.0
    %158 = vmatpush2.msra.mxu0 0.0
    %159 = vmatprep.subr.mxu0 0.0
    %160 = vmatpush2.msra.mxu0 0.0
    %161 = vmatprep.subr.mxu0 0.0
    %162 = vmatpush2.msra.mxu0 0.0
    %163 = vmatprep.subr.mxu0 0.0
    %164 = vmatpush2.msra.mxu0 0.0
    %165 = vmatprep.subr.mxu0 0.0
    %166 = vmatpush2.msra.mxu0 0.0
    %167 = vmatprep.subr.mxu0 0.0
    %168 = vmatpush2.msra.mxu0 0.0
    %169 = vmatprep.subr.mxu0 0.0
    %170 = vmatpush2.msra.mxu0 0.0
    %171 = vmatprep.subr.mxu0 0.0
    %172 = vmatpush2.msra.mxu0 0.0
    %173 = vmatprep.mubr.f32.mxu0 0.0
    %174 = vmatmul.mubr.f32.gmra.mxu0 %v62
    %v175 = vpop.f32.mrf.mxu0
    %v176 = vadd.f32 %v48, %v175
    %v177 = vpop.f32.mrf.mxu0
    %v178 = vadd.f32 %v52, %v177
    %179 = vmatprep.mubr.f32.mxu0 0.0
    %180 = vmatmul.mubr.f32.gmra.mxu0 %v65
    %v181 = vpop.f32.mrf.mxu0
    %v182 = vadd.f32 %v48, %v181
    %v183 = vpop.f32.mrf.mxu0
    %v184 = vadd.f32 %v52, %v183
    %185 = vmatprep.mubr.f32.mxu0 0.0
    %186 = vmatmul.mubr.f32.gmra.mxu0 %v68
    %v187 = vpop.f32.mrf.mxu0
    %v188 = vadd.f32 %v48, %v187
    %v189 = vpop.f32.mrf.mxu0
    %v190 = vadd.f32 %v52, %v189
    %191 = vmatprep.mubr.f32.mxu0 0.0
    %192 = vmatmul.mubr.f32.gmra.mxu0 %v71
    %v193 = vpop.f32.mrf.mxu0
    %v194 = vadd.f32 %v48, %v193
    %v195 = vpop.f32.mrf.mxu0
    %v196 = vadd.f32 %v52, %v195
    %197 = vmatprep.mubr.f32.mxu0 0.0
    %198 = vmatmul.mubr.f32.gmra.mxu0 %v74
    %v199 = vpop.f32.mrf.mxu0
    %v200 = vadd.f32 %v48, %v199
    %v201 = vpop.f32.mrf.mxu0
    %v202 = vadd.f32 %v52, %v201
    %203 = vmatprep.mubr.f32.mxu0 0.0
    %204 = vmatmul.mubr.f32.gmra.mxu0 %v77
    %v205 = vpop.f32.mrf.mxu0
    %v206 = vadd.f32 %v48, %v205
    %v207 = vpop.f32.mrf.mxu0
    %v208 = vadd.f32 %v52, %v207
    %209 = vmatprep.mubr.f32.mxu0 0.0
    %210 = vmatmul.mubr.f32.gmra.mxu0 %v80
    %v211 = vpop.f32.mrf.mxu0
    %v212 = vadd.f32 %v48, %v211
    %v213 = vpop.f32.mrf.mxu0
    %v214 = vadd.f32 %v52, %v213
    %215 = vmatprep.mubr.f32.mxu0 0.0
    %216 = vmatmul.mubr.f32.gmra.mxu0 %v83
    %v217 = vpop.f32.mrf.mxu0
    %v218 = vadd.f32 %v48, %v217
    %v219 = vpop.f32.mrf.mxu0
    %v220 = vadd.f32 %v52, %v219
    %221 = vmatprep.mubr.f32.mxu0 0.0
    %222 = vmatmul.mubr.f32.gmra.mxu0 %v86
    %v223 = vpop.f32.mrf.mxu0
    %v224 = vadd.f32 %v48, %v223
    %v225 = vpop.f32.mrf.mxu0
    %v226 = vadd.f32 %v52, %v225
    %227 = vmatprep.mubr.f32.mxu0 0.0
    %228 = vmatmul.mubr.f32.gmra.mxu0 %v89
    %v229 = vpop.f32.mrf.mxu0
    %v230 = vadd.f32 %v48, %v229
    %v231 = vpop.f32.mrf.mxu0
    %v232 = vadd.f32 %v52, %v231
    %233 = vmatprep.mubr.f32.mxu0 0.0
    %234 = vmatmul.mubr.f32.gmra.mxu0 %v92
    %v235 = vpop.f32.mrf.mxu0
    %v236 = vadd.f32 %v48, %v235
    %v237 = vpop.f32.mrf.mxu0
    %v238 = vadd.f32 %v52, %v237
    %239 = vmatprep.mubr.f32.mxu0 0.0
    %240 = vmatmul.mubr.f32.gmra.mxu0 %v95
    %v241 = vpop.f32.mrf.mxu0
    %v242 = vadd.f32 %v48, %v241
    %v243 = vpop.f32.mrf.mxu0
    %v244 = vadd.f32 %v52, %v243
    %245 = vmatprep.mubr.f32.mxu0 0.0
    %246 = vmatmul.mubr.f32.gmra.mxu0 %v98
    %v247 = vpop.f32.mrf.mxu0
    %v248 = vadd.f32 %v48, %v247
    %v249 = vpop.f32.mrf.mxu0
    %v250 = vadd.f32 %v52, %v249
    %251 = vmatprep.mubr.f32.mxu0 0.0
    %252 = vmatmul.mubr.f32.gmra.mxu0 %v101
    %v253 = vpop.f32.mrf.mxu0
    %v254 = vadd.f32 %v48, %v253
    %v255 = vpop.f32.mrf.mxu0
    %v256 = vadd.f32 %v52, %v255
    %257 = vmatprep.mubr.f32.mxu0 0.0
    %258 = vmatmul.mubr.f32.gmra.mxu0 %v104
    %v259 = vpop.f32.mrf.mxu0
    %v260 = vadd.f32 %v48, %v259
    %v261 = vpop.f32.mrf.mxu0
    %v262 = vadd.f32 %v52, %v261
    %263 = vmatprep.mubr.f32.mxu0 0.0
    %264 = vmatmul.mubr.f32.gmra.mxu0 %v107
    %v265 = vpop.f32.mrf.mxu0
    %v266 = vadd.f32 %v48, %v265
    %v267 = vpop.f32.mrf.mxu0
    %v268 = vadd.f32 %v52, %v267
    %269 = vdwg.mxu0
    %270 = vmatprep.subr.mxu0 0.0
    %271 = vmatpush1.msra.mxu0 0.0
    %272 = vmatprep.subr.mxu0 0.0
    %273 = vmatpush1.msra.mxu0 0.0
    %274 = vmatprep.subr.mxu0 0.0
    %275 = vmatpush1.msra.mxu0 0.0
    %276 = vmatprep.subr.mxu0 0.0
    %277 = vmatpush1.msra.mxu0 0.0
    %278 = vmatprep.subr.mxu0 0.0
    %279 = vmatpush1.msra.mxu0 0.0
    %280 = vmatprep.subr.mxu0 0.0
    %281 = vmatpush1.msra.mxu0 0.0
    %282 = vmatprep.subr.mxu0 0.0
    %283 = vmatpush1.msra.mxu0 0.0
    %284 = vmatprep.subr.mxu0 0.0
    %285 = vmatpush1.msra.mxu0 0.0
    %286 = vmatprep.subr.mxu0 0.0
    %287 = vmatpush1.msra.mxu0 0.0
    %288 = vmatprep.subr.mxu0 0.0
    %289 = vmatpush1.msra.mxu0 0.0
    %290 = vmatprep.subr.mxu0 0.0
    %291 = vmatpush1.msra.mxu0 0.0
    %292 = vmatprep.subr.mxu0 0.0
    %293 = vmatpush1.msra.mxu0 0.0
    %294 = vmatprep.subr.mxu0 0.0
    %295 = vmatpush1.msra.mxu0 %v42
    %296 = vmatprep.subr.mxu0 0.0
    %297 = vmatpush1.msra.mxu0 %v39
    %298 = vmatprep.subr.mxu0 0.0
    %299 = vmatpush1.msra.mxu0 %v36
    %300 = vmatprep.subr.mxu0 0.0
    %301 = vmatpush1.msra.mxu0 %v33
    %302 = vmatprep.subr.mxu0 0.0
    %303 = vmatpush2.msra.mxu0 0.0
    %304 = vmatprep.subr.mxu0 0.0
    %305 = vmatpush2.msra.mxu0 0.0
    %306 = vmatprep.subr.mxu0 0.0
    %307 = vmatpush2.msra.mxu0 0.0
    %308 = vmatprep.subr.mxu0 0.0
    %309 = vmatpush2.msra.mxu0 0.0
    %310 = vmatprep.subr.mxu0 0.0
    %311 = vmatpush2.msra.mxu0 0.0
    %312 = vmatprep.subr.mxu0 0.0
    %313 = vmatpush2.msra.mxu0 0.0
    %314 = vmatprep.subr.mxu0 0.0
    %315 = vmatpush2.msra.mxu0 0.0
    %316 = vmatprep.subr.mxu0 0.0
    %317 = vmatpush2.msra.mxu0 0.0
    %318 = vmatprep.subr.mxu0 0.0
    %319 = vmatpush2.msra.mxu0 0.0
    %320 = vmatprep.subr.mxu0 0.0
    %321 = vmatpush2.msra.mxu0 0.0
    %322 = vmatprep.subr.mxu0 0.0
    %323 = vmatpush2.msra.mxu0 0.0
    %324 = vmatprep.subr.mxu0 0.0
    %325 = vmatpush2.msra.mxu0 0.0
    %326 = vmatprep.subr.mxu0 0.0
    %327 = vmatpush2.msra.mxu0 0.0
    %328 = vmatprep.subr.mxu0 0.0
    %329 = vmatpush2.msra.mxu0 0.0
    %330 = vmatprep.subr.mxu0 0.0
    %331 = vmatpush2.msra.mxu0 0.0
    %332 = vmatprep.subr.mxu0 0.0
    %333 = vmatpush2.msra.mxu0 0.0
    %334 = vmatprep.mubr.f32.mxu0 0.0
    %335 = vmatmul.mubr.f32.gmra.mxu0 %v62
    %v336 = vpop.f32.mrf.mxu0
    %v337 = vadd.f32 %v56, %v336
    %v338 = vpop.f32.mrf.mxu0
    %339 = vmatprep.mubr.f32.mxu0 0.0
    %340 = vmatmul.mubr.f32.gmra.mxu0 %v65
    %v341 = vpop.f32.mrf.mxu0
    %v342 = vadd.f32 %v56, %v341
    %v343 = vpop.f32.mrf.mxu0
    %344 = vmatprep.mubr.f32.mxu0 0.0
    %345 = vmatmul.mubr.f32.gmra.mxu0 %v68
    %v346 = vpop.f32.mrf.mxu0
    %v347 = vadd.f32 %v56, %v346
    %v348 = vpop.f32.mrf.mxu0
    %349 = vmatprep.mubr.f32.mxu0 0.0
    %350 = vmatmul.mubr.f32.gmra.mxu0 %v71
    %v351 = vpop.f32.mrf.mxu0
    %v352 = vadd.f32 %v56, %v351
    %v353 = vpop.f32.mrf.mxu0
    %354 = vmatprep.mubr.f32.mxu0 0.0
    %355 = vmatmul.mubr.f32.gmra.mxu0 %v74
    %v356 = vpop.f32.mrf.mxu0
    %v357 = vadd.f32 %v56, %v356
    %v358 = vpop.f32.mrf.mxu0
    %359 = vmatprep.mubr.f32.mxu0 0.0
    %360 = vmatmul.mubr.f32.gmra.mxu0 %v77
    %v361 = vpop.f32.mrf.mxu0
    %v362 = vadd.f32 %v56, %v361
    %v363 = vpop.f32.mrf.mxu0
    %364 = vmatprep.mubr.f32.mxu0 0.0
    %365 = vmatmul.mubr.f32.gmra.mxu0 %v80
    %v366 = vpop.f32.mrf.mxu0
    %v367 = vadd.f32 %v56, %v366
    %v368 = vpop.f32.mrf.mxu0
    %369 = vmatprep.mubr.f32.mxu0 0.0
    %370 = vmatmul.mubr.f32.gmra.mxu0 %v83
    %v371 = vpop.f32.mrf.mxu0
    %v372 = vadd.f32 %v56, %v371
    %v373 = vpop.f32.mrf.mxu0
    %374 = vmatprep.mubr.f32.mxu0 0.0
    %375 = vmatmul.mubr.f32.gmra.mxu0 %v86
    %v376 = vpop.f32.mrf.mxu0
    %v377 = vadd.f32 %v56, %v376
    %v378 = vpop.f32.mrf.mxu0
    %379 = vmatprep.mubr.f32.mxu0 0.0
    %380 = vmatmul.mubr.f32.gmra.mxu0 %v89
    %v381 = vpop.f32.mrf.mxu0
    %v382 = vadd.f32 %v56, %v381
    %v383 = vpop.f32.mrf.mxu0
    %384 = vmatprep.mubr.f32.mxu0 0.0
    %385 = vmatmul.mubr.f32.gmra.mxu0 %v92
    %v386 = vpop.f32.mrf.mxu0
    %v387 = vadd.f32 %v56, %v386
    %v388 = vpop.f32.mrf.mxu0
    %389 = vmatprep.mubr.f32.mxu0 0.0
    %390 = vmatmul.mubr.f32.gmra.mxu0 %v95
    %v391 = vpop.f32.mrf.mxu0
    %v392 = vadd.f32 %v56, %v391
    %v393 = vpop.f32.mrf.mxu0
    %394 = vmatprep.mubr.f32.mxu0 0.0
    %395 = vmatmul.mubr.f32.gmra.mxu0 %v98
    %v396 = vpop.f32.mrf.mxu0
    %v397 = vadd.f32 %v56, %v396
    %v398 = vpop.f32.mrf.mxu0
    %399 = vmatprep.mubr.f32.mxu0 0.0
    %400 = vmatmul.mubr.f32.gmra.mxu0 %v101
    %v401 = vpop.f32.mrf.mxu0
    %v402 = vadd.f32 %v56, %v401
    %v403 = vpop.f32.mrf.mxu0
    %404 = vmatprep.mubr.f32.mxu0 0.0
    %405 = vmatmul.mubr.f32.gmra.mxu0 %v104
    %v406 = vpop.f32.mrf.mxu0
    %v407 = vadd.f32 %v56, %v406
    %v408 = vpop.f32.mrf.mxu0
    %409 = vmatprep.mubr.f32.mxu0 0.0
    %410 = vmatmul.mubr.f32.gmra.mxu0 %v107
    %v411 = vpop.f32.mrf.mxu0
    %v412 = vadd.f32 %v56, %v411
    %v413 = vpop.f32.mrf.mxu0
    %414 = vdwg.mxu0
    %415 = vst [vmem:[#allocation2] sm:$0xff] %v176
    %416 = vst [vmem:[#allocation2 + $0x8] sm:$0xff] %v178
    %417 = vst [vmem:[#allocation2 + $0x10] sm:$0xff] %v337
    %418 = vst [vmem:[#allocation2 + $0x18] sm:$0xff] %v182
    %419 = vst [vmem:[#allocation2 + $0x20] sm:$0xff] %v184
    %420 = vst [vmem:[#allocation2 + $0x28] sm:$0xff] %v342
    %421 = vst [vmem:[#allocation2 + $0x30] sm:$0xff] %v188
    %422 = vst [vmem:[#allocation2 + $0x38] sm:$0xff] %v190
    %423 = vst [vmem:[#allocation2 + $0x40] sm:$0xff] %v347
    %424 = vst [vmem:[#allocation2 + $0x48] sm:$0xff] %v194
    %425 = vst [vmem:[#allocation2 + $0x50] sm:$0xff] %v196
    %426 = vst [vmem:[#allocation2 + $0x58] sm:$0xff] %v352
    %427 = vst [vmem:[#allocation2 + $0x60] sm:$0xff] %v200
    %428 = vst [vmem:[#allocation2 + $0x68] sm:$0xff] %v202
    %429 = vst [vmem:[#allocation2 + $0x70] sm:$0xff] %v357
    %430 = vst [vmem:[#allocation2 + $0x78] sm:$0xff] %v206
    %431 = vst [vmem:[#allocation2 + $0x80] sm:$0xff] %v208
    %432 = vst [vmem:[#allocation2 + $0x88] sm:$0xff] %v362
    %433 = vst [vmem:[#allocation2 + $0x90] sm:$0xff] %v212
    %434 = vst [vmem:[#allocation2 + $0x98] sm:$0xff] %v214
    %435 = vst [vmem:[#allocation2 + $0xa0] sm:$0xff] %v367
    %436 = vst [vmem:[#allocation2 + $0xa8] sm:$0xff] %v218
    %437 = vst [vmem:[#allocation2 + $0xb0] sm:$0xff] %v220
    %438 = vst [vmem:[#allocation2 + $0xb8] sm:$0xff] %v372
    %439 = vst [vmem:[#allocation2 + $0xc0] sm:$0xff] %v224
    %440 = vst [vmem:[#allocation2 + $0xc8] sm:$0xff] %v226
    %441 = vst [vmem:[#allocation2 + $0xd0] sm:$0xff] %v377
    %442 = vst [vmem:[#allocation2 + $0xd8] sm:$0xff] %v230
    %443 = vst [vmem:[#allocation2 + $0xe0] sm:$0xff] %v232
    %444 = vst [vmem:[#allocation2 + $0xe8] sm:$0xff] %v382
    %445 = vst [vmem:[#allocation2 + $0xf0] sm:$0xff] %v236
    %446 = vst [vmem:[#allocation2 + $0xf8] sm:$0xff] %v238
    %447 = vst [vmem:[#allocation2 + $0x100] sm:$0xff] %v387
    %448 = vst [vmem:[#allocation2 + $0x108] sm:$0xff] %v242
    %449 = vst [vmem:[#allocation2 + $0x110] sm:$0xff] %v244
    %450 = vst [vmem:[#allocation2 + $0x118] sm:$0xff] %v392
    %451 = vst [vmem:[#allocation2 + $0x120] sm:$0xff] %v248
    %452 = vst [vmem:[#allocation2 + $0x128] sm:$0xff] %v250
    %453 = vst [vmem:[#allocation2 + $0x130] sm:$0xff] %v397
    %454 = vst [vmem:[#allocation2 + $0x138] sm:$0xff] %v254
    %455 = vst [vmem:[#allocation2 + $0x140] sm:$0xff] %v256
    %456 = vst [vmem:[#allocation2 + $0x148] sm:$0xff] %v402
    %457 = vst [vmem:[#allocation2 + $0x150] sm:$0xff] %v260
    %458 = vst [vmem:[#allocation2 + $0x158] sm:$0xff] %v262
    %459 = vst [vmem:[#allocation2 + $0x160] sm:$0xff] %v407
    %460 = vst [vmem:[#allocation2 + $0x168] sm:$0xff] %v266
    %461 = vst [vmem:[#allocation2 + $0x170] sm:$0xff] %v268
    %462 = vst [vmem:[#allocation2 + $0x178] sm:$0xff] %v412
    // Predicated region
    $region14: #{tpu_custom_call.1} parent=1 // pred_check
      _
    $region15: #{tpu_custom_call.1} parent=1 // pred_check_branch
      %464 = sbr.rel (0) target = $region17
    $region16: #{tpu_custom_call.1} parent=1 // pred_region
      %s466 = ssub.s32 6144, 6144
      %467 = vsyncadd [#allocation3], %s466
      %s468 = sshll.u32 [#allocation2], 4
      %s469 = int_to_ptr.vmem [resolvable:$true] %s468
      %474 = dma.vmem_to_hbm [thread:$0]  %s469, 6144, %s3, [#allocation3], 384, 384, 24
    $region17: #{tpu_custom_call.1} parent=1 // pred_fallthru
      _
    // Predicated region
    $region18: #{tpu_custom_call.1} parent=1 // pred_check
      _
    $region19: #{tpu_custom_call.1} parent=1 // pred_check_branch
      %476 = sbr.rel (0) target = $region21
    $region20: #{tpu_custom_call.1} parent=1 // pred_region
      %477 = dma.done [#allocation3], 6144
    $region21: #{tpu_custom_call.1} parent=1 // pred_fallthru
      _
    %478 = vsyncpa [#allocation3], 1

</llo_original>
